<compile_context>
chip_gen: v6e
topology: v6e:2x2x1
jax: 0.10.0
libtpu: 0.0.40
codegen_flags: <defaults>
</compile_context>

<pallas_src>
import numpy as np
import jax
import jax.numpy as jnp
from jax.experimental import pallas as pl
from jax.experimental.pallas import tpu as pltpu


def _round_up(x, m):
    return (x + m - 1) // m * m


def conv_bn_relu_kernel(p_ref, w_ref, s_ref, b_ref, o_ref):
    """One batch element: out = relu(scale * (W @ patches) + bias).

    p_ref : (1, K2Cin, Pp)  im2col patches, spatial on the lane dim
    w_ref : (Cout, K2Cin)   conv weight, flattened (OIHW -> O, I*kh*kw)
    s_ref : (Cout, 1)       folded eval-mode BN scale
    b_ref : (Cout, 1)       folded eval-mode BN bias
    o_ref : (1, Cout, Pp)   lane-dense output (Pp multiple of 128)
    """
    acc = jnp.dot(w_ref[...], p_ref[0],
                  preferred_element_type=jnp.float32)        # (Cout, Pp) on MXU
    o_ref[0] = jnp.maximum(acc * s_ref[...] + b_ref[...], 0.0)


def conv_bn_relu_forward(x, weight, bn_params, *, stride, padding, dilation,
                         eps=1e-5):
    """Matches ConvBNReLU.forward(x) in eval mode.

    x       : (N, Cin, H, W) float32, NCHW (native PyTorch layout)
    weight  : (Cout, Cin, kh, kw) float32 (nn.Conv2d weight, bias=False)
    bn_params: (gamma, beta, running_mean, running_var), each (Cout,)
    Returns : (N, Cout, Ho, Wo) float32
    """
    N, Cin, H, W = x.shape
    Cout, _, kh, kw = weight.shape

    Ho = (H + 2 * padding - dilation * (kh - 1) - 1) // stride + 1
    Wo = (W + 2 * padding - dilation * (kw - 1) - 1) // stride + 1
    P = Ho * Wo
    Pp = _round_up(P, 128)
    K2Cin = Cin * kh * kw

    # ---- fold eval-mode BN into per-channel scale / bias ----
    # TODO(synk): training-mode (cross-replica batch statistics) BN is not
    # implemented; eval-mode running stats are folded into scale/bias.
    gamma, beta, mean, var = bn_params
    scale = gamma / jnp.sqrt(var + eps)
    bias = beta - mean * scale
    scale = scale.reshape(Cout, 1).astype(jnp.float32)
    bias = bias.reshape(Cout, 1).astype(jnp.float32)

    # ---- im2col in the wrapper (single HBM pass; kernel sees one matmul) ----
    xp = jnp.pad(x, ((0, 0), (0, 0), (padding, padding), (padding, padding)))
    taps = []
    for ky in range(kh):
        for kx in range(kw):
            y0 = ky * dilation
            x0 = kx * dilation
            sl = jax.lax.slice(
                xp,
                (0, 0, y0, x0),
                (N, Cin, y0 + (Ho - 1) * stride + 1,
                 x0 + (Wo - 1) * stride + 1),
                (1, 1, stride, stride))                      # (N, Cin, Ho, Wo)
            taps.append(sl)
    patches = jnp.stack(taps, axis=2)                        # (N, Cin, kh*kw, Ho, Wo)
    patches = patches.reshape(N, K2Cin, P)
    if Pp != P:
        patches = jnp.pad(patches, ((0, 0), (0, 0), (0, Pp - P)))

    # Weight flattening (Cout, Cin*kh*kw) matches the patch stacking order.
    w_mat = weight.reshape(Cout, K2Cin).astype(jnp.float32)
    # TODO(synk): at production Cin*k*k sizes, cast w_mat/patches to bf16 (keep
    # f32 accumulation) for MXU throughput; kept f32 here to match the f32
    # reference tightly at toy sizes.

    out = pl.pallas_call(
        conv_bn_relu_kernel,
        grid_spec=pltpu.PrefetchScalarGridSpec(
            num_scalar_prefetch=0,
            grid=(N,),
            in_specs=[
                pl.BlockSpec((1, K2Cin, Pp), lambda n: (n, 0, 0)),
                pl.BlockSpec((Cout, K2Cin), lambda n: (0, 0)),
                pl.BlockSpec((Cout, 1), lambda n: (0, 0)),
                pl.BlockSpec((Cout, 1), lambda n: (0, 0)),
            ],
            out_specs=pl.BlockSpec((1, Cout, Pp), lambda n: (n, 0, 0)),
        ),
        out_shape=jax.ShapeDtypeStruct((N, Cout, Pp), jnp.float32),
        compiler_params=pltpu.CompilerParams(
            dimension_semantics=("parallel",)),
    )(patches, w_mat, scale, bias)

    return out[:, :, :P].reshape(N, Cout, Ho, Wo)


def ref_conv_bn_relu(x, weight, bn_params, *, stride, padding, dilation,
                     eps=1e-5):
    """Pure-JAX reference (same eval-mode BN folding)."""
    gamma, beta, mean, var = bn_params
    y = jax.lax.conv_general_dilated(
        x, weight, window_strides=(stride, stride),
        padding=((padding, padding), (padding, padding)),
        rhs_dilation=(dilation, dilation),
        dimension_numbers=('NCHW', 'OIHW', 'NCHW'))
    s = (gamma / jnp.sqrt(var + eps))[None, :, None, None]
    b = (beta - mean * gamma / jnp.sqrt(var + eps))[None, :, None, None]
    return jax.nn.relu(y * s + b)


if __name__ == "__main__":
    key = jax.random.PRNGKey(0)
    kx, kw, kg, kb, km, kv = jax.random.split(key, 6)

    N, Cin, Cout, H, W, K = 2, 4, 8, 16, 16, 3
    x = jax.random.normal(kx, (N, Cin, H, W), jnp.float32)
    weight = 0.1 * jax.random.normal(kw, (Cout, Cin, K, K), jnp.float32)
    gamma = 1.0 + 0.1 * jax.random.normal(kg, (Cout,), jnp.float32)
    beta = 0.1 * jax.random.normal(kb, (Cout,), jnp.float32)
    mean = 0.1 * jax.random.normal(km, (Cout,), jnp.float32)
    var = 0.5 + jax.random.uniform(kv, (Cout,), jnp.float32)
    bn = (gamma, beta, mean, var)

    # Exercise both a plain 3x3 conv and a strided/dilated configuration.
    configs = [dict(stride=1, padding=1, dilation=1),
               dict(stride=2, padding=2, dilation=2)]
    for cfg in configs:
        out = conv_bn_relu_forward(x, weight, bn, **cfg)
        jax.block_until_ready(out)
        ref = ref_conv_bn_relu(x, weight, bn, **cfg)
        np.testing.assert_allclose(np.asarray(out), np.asarray(ref),
                                   rtol=1e-4, atol=1e-4)

    assert out.shape[0] == N and out.shape[1] == Cout
    print("KERNEL_OK")
</pallas_src>

<mosaic_0001>
module attributes {stable_mosaic.version = 11 : i64} {
  func.func @conv_bn_relu_kernel(%arg0: i32, %arg1: memref<1x36x256xf32, #tpu.memory_space<vmem>>, %arg2: memref<8x36xf32, #tpu.memory_space<vmem>>, %arg3: memref<8x1xf32, #tpu.memory_space<vmem>>, %arg4: memref<8x1xf32, #tpu.memory_space<vmem>>, %arg5: memref<1x8x256xf32, #tpu.memory_space<vmem>>) attributes {dimension_semantics = [#tpu.dimension_semantics<parallel>], iteration_bounds = array<i64: 2>, scalar_prefetch = 0 : i64, scratch_operands = 0 : i64, tpu.core_type = #tpu.core_type<tc>, window_params = [{transform_indices = @transform_0, window_bounds = array<i64: 1, 36, 256>}, {pipeline_mode = #tpu.pipeline_mode<synchronous>, transform_indices = @transform_1, window_bounds = array<i64: 8, 36>}, {pipeline_mode = #tpu.pipeline_mode<synchronous>, transform_indices = @transform_2, window_bounds = array<i64: 8, 1>}, {pipeline_mode = #tpu.pipeline_mode<synchronous>, transform_indices = @transform_3, window_bounds = array<i64: 8, 1>}, {transform_indices = @transform_4, window_bounds = array<i64: 1, 8, 256>}]} {
    %c0 = arith.constant 0 : index
    %c0_0 = arith.constant 0 : index
    %0 = vector.load %arg2[%c0, %c0_0] : memref<8x36xf32, #tpu.memory_space<vmem>>, vector<8x36xf32>
    %c0_1 = arith.constant 0 : index
    %c0_2 = arith.constant 0 : index
    %c0_3 = arith.constant 0 : index
    %1 = vector.load %arg1[%c0_1, %c0_2, %c0_3] : memref<1x36x256xf32, #tpu.memory_space<vmem>>, vector<1x36x256xf32>
    %2 = vector.shape_cast %1 : vector<1x36x256xf32> to vector<36x256xf32>
    %cst = arith.constant dense<0.000000e+00> : vector<8x256xf32>
    %3 = tpu.matmul %0, %2, %cst {dimension_numbers = #tpu.dot_dimension_numbers<[1], [0], [0], [1], [0, 0, 1, 1], [], []>} : vector<8x36xf32>, vector<36x256xf32>, vector<8x256xf32> -> vector<8x256xf32>
    %c0_4 = arith.constant 0 : index
    %c0_5 = arith.constant 0 : index
    %4 = vector.load %arg3[%c0_4, %c0_5] : memref<8x1xf32, #tpu.memory_space<vmem>>, vector<8x1xf32>
    %5 = vector.broadcast %4 : vector<8x1xf32> to vector<8x256xf32>
    %6 = arith.mulf %3, %5 : vector<8x256xf32>
    %c0_6 = arith.constant 0 : index
    %c0_7 = arith.constant 0 : index
    %7 = vector.load %arg4[%c0_6, %c0_7] : memref<8x1xf32, #tpu.memory_space<vmem>>, vector<8x1xf32>
    %8 = vector.broadcast %7 : vector<8x1xf32> to vector<8x256xf32>
    %9 = arith.addf %6, %8 : vector<8x256xf32>
    %cst_8 = arith.constant 0.000000e+00 : f32
    %10 = vector.broadcast %cst_8 : f32 to vector<8x256xf32>
    %11 = arith.maximumf %9, %10 : vector<8x256xf32>
    %c0_9 = arith.constant 0 : index
    %c0_10 = arith.constant 0 : index
    %c0_11 = arith.constant 0 : index
    %12 = vector.load %arg5[%c0_9, %c0_10, %c0_11] : memref<1x8x256xf32, #tpu.memory_space<vmem>>, vector<1x8x256xf32>
    %13 = vector.shape_cast %12 : vector<1x8x256xf32> to vector<8x256xf32>
    %14 = vector.shape_cast %11 : vector<8x256xf32> to vector<1x8x256xf32>
    tpu.vector_store %arg5[%c0_9, %c0_10, %c0_11], %14 {strides = array<i32>} : memref<1x8x256xf32, #tpu.memory_space<vmem>>, vector<1x8x256xf32>,
    return
  }
  func.func @transform_0(%arg0: i32) -> (i32, i32, i32) {
    %c0_i32 = arith.constant 0 : i32
    %c0_i32_0 = arith.constant 0 : i32
    %c0_i32_1 = arith.constant 0 : i32
    return %arg0, %c0_i32, %c0_i32_0 : i32, i32, i32
  }
  func.func @transform_1(%arg0: i32) -> (i32, i32) {
    %c0_i32 = arith.constant 0 : i32
    %c0_i32_0 = arith.constant 0 : i32
    %c0_i32_1 = arith.constant 0 : i32
    return %c0_i32, %c0_i32_0 : i32, i32
  }
  func.func @transform_2(%arg0: i32) -> (i32, i32) {
    %c0_i32 = arith.constant 0 : i32
    %c0_i32_0 = arith.constant 0 : i32
    %c0_i32_1 = arith.constant 0 : i32
    return %c0_i32, %c0_i32_0 : i32, i32
  }
  func.func @transform_3(%arg0: i32) -> (i32, i32) {
    %c0_i32 = arith.constant 0 : i32
    %c0_i32_0 = arith.constant 0 : i32
    %c0_i32_1 = arith.constant 0 : i32
    return %c0_i32, %c0_i32_0 : i32, i32
  }
  func.func @transform_4(%arg0: i32) -> (i32, i32, i32) {
    %c0_i32 = arith.constant 0 : i32
    %c0_i32_0 = arith.constant 0 : i32
    %c0_i32_1 = arith.constant 0 : i32
    return %arg0, %c0_i32, %c0_i32_0 : i32, i32, i32
  }
}

</mosaic_0001>

<llo_original>
// kernel: tpu_custom_call.1
$region0: #{tpu_custom_call.1}
  #allocation0 [shape = 'u32[]', space=smem, size = 0x4, offset = 0x4, fixed_abs, tag = 'smem constant byte address 0x4 - core index']
  #allocation1 [shape = 'u32[144,128]{1,0:T(1,128)}', space=vmem, size = 0x12000, scoped, tag = 'internal scratch']
  %s0 = inlined_call_operand.vmem [shape: f32[2,36,256], index: 0, kind: input, shape index: {}]
  %s1 = inlined_call_operand.vmem [shape: f32[8,36], index: 1, kind: input, shape index: {}]
  %s2 = inlined_call_operand.vmem [shape: f32[8,1], index: 2, kind: input, shape index: {}]
  %s3 = inlined_call_operand.vmem [shape: f32[8,1], index: 3, kind: input, shape index: {}]
  %s4 = inlined_call_operand.hbm [shape: f32[2,8,256], index: 4, kind: output, shape index: {}]
  %s5 = sld [smem:[#allocation0]]
  $region49: #{tpu_custom_call.1} parent=0
    _
  %s7 = ssub.s32 1, %s5
  %s8 = scalar_select 0, %s7, %s5
  $region1: #{tpu_custom_call.1} parent=0
    #allocation2 [shape = 'u8[16384]{0}', space=vmem, size = 0x4000, scoped, tag = 'output window, operand 0']
    #allocation3 [shape = 's32[2]{0}', space=sflag, size = 0x8, scoped, tag = 'scoped memory for tpu_custom_call.1']
    %9 = vsyncpa [#allocation3], 0
    %s10 = scalar_lea.sflag [#allocation3], 1
    %11 = vsyncpa %s10, 0
    loop: start=0, step=1, limit=4
    $region2: #{tpu_custom_call.1} parent=1 // loop_pre_header
      _
    $region3: #{tpu_custom_call.1} parent=1 // loop_header
      %s13 = sphi 0, %s17
      %p14 = scmp.ge.s32.totalorder %s13, 4
      %s23 = sphi 0, %s25
      %s26 = sphi 0, %s23
      %s27 = sphi 0, %s26
      %s43 = sphi 0, %s27
      %s47 = sphi 0, %s47
      %s49 = sphi 0, %s47
      %s50 = sphi 0, %s49
      %s64 = sphi 0, %s50
      %s68 = sphi 0, %s68
      %s70 = sphi 0, %s68
      %s71 = sphi 0, %s70
      %s85 = sphi 0, %s71
      %s89 = sphi 0, %s89
      %s91 = sphi 0, %s89
      %s92 = sphi 0, %s91
      %s106 = sphi 0, %s92
      %s112 = sphi 0, %s114
      %s115 = sphi 0, %s112
      %s116 = sphi 0, %s115
      %s132 = sphi 0, %s116
    $region4: #{tpu_custom_call.1} parent=1 // loop_header_branch
      %16 = sbr.rel (%p14) target = $region8
    $region5: #{tpu_custom_call.1} parent=1 // loop_body
      %s18 = ssub.s32 %s13, 1
      %s19 = ssub.s32 %s13, 2
      %s20 = sadd.s32 %s13, 1
      %s21 = ssub.s32 %s13, %s20
      %p22 = scmp.eq.s32.totalorder %s21, 0
      %s24 = sadd.s32 %s23, 1
      %s25 = scalar_select %p22, %s23, %s24
      %p28 = pneg %p22
      %p29 = scmp.eq.s32.totalorder %s13, 1
      %p30 = por %p28, %p29
      %p31 = scmp.ne.s32.totalorder %s23, %s26
      %p32 = scmp.eq.s32.totalorder %s13, 0
      %p33 = por %p31, %p32
      %p34 = scmp.ne.s32.totalorder %s23, %s26
      %p35 = scmp.eq.s32.totalorder %s18, 1
      %p36 = por %p34, %p35
      %p37 = scmp.ne.s32.totalorder %s26, %s27
      %p38 = scmp.eq.s32.totalorder %s18, 0
      %p39 = por %p37, %p38
      %p40 = scmp.ne.s32.totalorder %s26, %s27
      %p41 = scmp.eq.s32.totalorder %s19, 1
      %p42 = por %p40, %p41
      %p44 = scmp.ne.s32.totalorder %s27, %s43
      %p45 = scmp.eq.s32.totalorder %s19, 0
      %p46 = por %p44, %p45
      %s48 = sadd.s32 %s47, 1
      %p51 = scmp.eq.s32.totalorder %s13, 1
      %p52 = scmp.ne.s32.totalorder %s47, %s49
      %p53 = scmp.eq.s32.totalorder %s13, 0
      %p54 = por %p52, %p53
      %p55 = scmp.ne.s32.totalorder %s47, %s49
      %p56 = scmp.eq.s32.totalorder %s18, 1
      %p57 = por %p55, %p56
      %p58 = scmp.ne.s32.totalorder %s49, %s50
      %p59 = scmp.eq.s32.totalorder %s18, 0
      %p60 = por %p58, %p59
      %p61 = scmp.ne.s32.totalorder %s49, %s50
      %p62 = scmp.eq.s32.totalorder %s19, 1
      %p63 = por %p61, %p62
      %p65 = scmp.ne.s32.totalorder %s50, %s64
      %p66 = scmp.eq.s32.totalorder %s19, 0
      %p67 = por %p65, %p66
      %s69 = sadd.s32 %s68, 1
      %p72 = scmp.eq.s32.totalorder %s13, 1
      %p73 = scmp.ne.s32.totalorder %s68, %s70
      %p74 = scmp.eq.s32.totalorder %s13, 0
      %p75 = por %p73, %p74
      %p76 = scmp.ne.s32.totalorder %s68, %s70
      %p77 = scmp.eq.s32.totalorder %s18, 1
      %p78 = por %p76, %p77
      %p79 = scmp.ne.s32.totalorder %s70, %s71
      %p80 = scmp.eq.s32.totalorder %s18, 0
      %p81 = por %p79, %p80
      %p82 = scmp.ne.s32.totalorder %s70, %s71
      %p83 = scmp.eq.s32.totalorder %s19, 1
      %p84 = por %p82, %p83
      %p86 = scmp.ne.s32.totalorder %s71, %s85
      %p87 = scmp.eq.s32.totalorder %s19, 0
      %p88 = por %p86, %p87
      %s90 = sadd.s32 %s89, 1
      %p93 = scmp.eq.s32.totalorder %s13, 1
      %p94 = scmp.ne.s32.totalorder %s89, %s91
      %p95 = scmp.eq.s32.totalorder %s13, 0
      %p96 = por %p94, %p95
      %p97 = scmp.ne.s32.totalorder %s89, %s91
      %p98 = scmp.eq.s32.totalorder %s18, 1
      %p99 = por %p97, %p98
      %p100 = scmp.ne.s32.totalorder %s91, %s92
      %p101 = scmp.eq.s32.totalorder %s18, 0
      %p102 = por %p100, %p101
      %p103 = scmp.ne.s32.totalorder %s91, %s92
      %p104 = scmp.eq.s32.totalorder %s19, 1
      %p105 = por %p103, %p104
      %p107 = scmp.ne.s32.totalorder %s92, %s106
      %p108 = scmp.eq.s32.totalorder %s19, 0
      %p109 = por %p107, %p108
      %s110 = ssub.s32 %s13, %s20
      %p111 = scmp.eq.s32.totalorder %s110, 0
      %s113 = sadd.s32 %s112, 1
      %s114 = scalar_select %p111, %s112, %s113
      %p117 = pneg %p111
      %p118 = scmp.eq.s32.totalorder %s13, 1
      %p119 = por %p117, %p118
      %p120 = scmp.ne.s32.totalorder %s112, %s115
      %p121 = scmp.eq.s32.totalorder %s13, 0
      %p122 = por %p120, %p121
      %p123 = scmp.ne.s32.totalorder %s112, %s115
      %p124 = scmp.eq.s32.totalorder %s18, 1
      %p125 = por %p123, %p124
      %p126 = scmp.ne.s32.totalorder %s115, %s116
      %p127 = scmp.eq.s32.totalorder %s18, 0
      %p128 = por %p126, %p127
      %p129 = scmp.ne.s32.totalorder %s115, %s116
      %p130 = scmp.eq.s32.totalorder %s19, 1
      %p131 = por %p129, %p130
      %p133 = scmp.ne.s32.totalorder %s116, %s132
      %p134 = scmp.eq.s32.totalorder %s19, 0
      %p135 = por %p133, %p134
      %p136 = scmp.le.s32.totalorder 1, %s13
      %p137 = scmp.lt.s32.totalorder %s13, 3
      %p138 = pnand %p136, %p137
      %p139 = pneg %p138
      // Predicated region
      $region9: #{tpu_custom_call.1} parent=5 // pred_check
        _
      $region10: #{tpu_custom_call.1} parent=5 // pred_check_branch
        %141 = sbr.rel (%p138) target = $region12
      $region11: #{tpu_custom_call.1} parent=5 // pred_region
        %s142 = ssub.s32 %s13, 1
        // Predicated region
        $region13: #{tpu_custom_call.1} parent=11 // pred_check
          %p143 = pneg %p60
        $region14: #{tpu_custom_call.1} parent=11 // pred_check_branch
          %145 = sbr.rel (%p143) target = $region16
        $region15: #{tpu_custom_call.1} parent=11 // pred_region
          _
        $region16: #{tpu_custom_call.1} parent=11 // pred_fallthru
          _
        // Predicated region
        $region17: #{tpu_custom_call.1} parent=11 // pred_check
          %p146 = pneg %p81
        $region18: #{tpu_custom_call.1} parent=11 // pred_check_branch
          %148 = sbr.rel (%p146) target = $region20
        $region19: #{tpu_custom_call.1} parent=11 // pred_region
          _
        $region20: #{tpu_custom_call.1} parent=11 // pred_fallthru
          _
        // Predicated region
        $region21: #{tpu_custom_call.1} parent=11 // pred_check
          %p149 = pneg %p102
        $region22: #{tpu_custom_call.1} parent=11 // pred_check_branch
          %151 = sbr.rel (%p149) target = $region24
        $region23: #{tpu_custom_call.1} parent=11 // pred_region
          _
        $region24: #{tpu_custom_call.1} parent=11 // pred_fallthru
          _
      $region12: #{tpu_custom_call.1} parent=5 // pred_fallthru
        _
      %p152 = scmp.lt.s32.totalorder %s13, 2
      // Predicated region
      $region25: #{tpu_custom_call.1} parent=5 // pred_check
        %p153 = pneg %p152
      $region26: #{tpu_custom_call.1} parent=5 // pred_check_branch
        %155 = sbr.rel (%p153) target = $region28
      $region27: #{tpu_custom_call.1} parent=5 // pred_region
        // Predicated region
        $region29: #{tpu_custom_call.1} parent=27 // pred_check
          %p156 = pneg %p33
        $region30: #{tpu_custom_call.1} parent=27 // pred_check_branch
          %158 = sbr.rel (%p156) target = $region32
        $region31: #{tpu_custom_call.1} parent=27 // pred_region
          %p159 = scmp.lt.s32.totalorder %s13, 1
          %s160 = scalar_select %p159, %s13, 1
          %s161 = smul.addr %s160, 10
          %s162 = smul.addr %s161, 8
          %s163 = scalar_lea.vmem %s0, %s162
        $region32: #{tpu_custom_call.1} parent=27 // pred_fallthru
          _
      $region28: #{tpu_custom_call.1} parent=5 // pred_fallthru
        _
      %p164 = scmp.le.s32.totalorder 1, %s13
      %p165 = scmp.lt.s32.totalorder %s13, 3
      %p166 = pnand %p164, %p165
      %p167 = pneg %p166
      // Predicated region
      $region33: #{tpu_custom_call.1} parent=5 // pred_check
        _
      $region34: #{tpu_custom_call.1} parent=5 // pred_check_branch
        %169 = sbr.rel (%p166) target = $region36
      $region35: #{tpu_custom_call.1} parent=5 // pred_region
        %s170 = ssub.s32 %s13, 1
        %p171 = scmp.lt.s32.totalorder %s18, 1
        %s172 = scalar_select %p171, %s18, 1
        %s173 = smul.addr %s172, 10
        %s174 = smul.addr %s173, 8
        %s175 = scalar_lea.vmem %s0, %s174
        %p176 = pneg %p39
        %p177 = pneg %p36
        %p178 = pneg %p60
        %p179 = pneg %p57
        %p180 = pneg %p81
        %p181 = pneg %p78
        %p182 = pneg %p102
        %p183 = pneg %p99
        %p184 = pneg %p128
        %p185 = pneg %p125
        %s186 = sand.u32 %s115, 1
        %s187 = scalar_lea.sflag [#allocation3], %s186
        %s188 = sand.u32 %s115, 1
        %s189 = smul.addr %s188, 16
        %s190 = scalar_lea.vmem [#allocation2], %s189
        %p191 = scmp.lt.s32.totalorder %s18, 1
        %s192 = scalar_select %p191, %s18, 1
        %s193 = smul.addr %s192, 10
        %s194 = smul.addr %s193, 8
        %s195 = scalar_lea.vmem %s0, %s194
        %v196 = vld [vmem:[%s1] sm:$0xff]
        %v197 = vld [vmem:[%s195] sm:$0xff]
        %v198 = vld [vmem:[%s195 + $0x8] sm:$0xff]
        %v199 = vld [vmem:[%s195 + $0x10] sm:$0xff]
        %v200 = vld [vmem:[%s195 + $0x18] sm:$0xff]
        %v201 = vld [vmem:[%s195 + $0x20] sm:$0xff]
        %v202 = vld [vmem:[%s195 + $0x28] sm:$0xff]
        %v203 = vld [vmem:[%s195 + $0x30] sm:$0xff]
        %v204 = vld [vmem:[%s195 + $0x38] sm:$0xff]
        %v205 = vld [vmem:[%s195 + $0x40] sm:$0xf]
        %v206 = vld [vmem:[%s195 + $0x48] sm:$0xf]
        %vm207 = vcmask 293888
        %v209 = vsel %vm207, %v196, 0
        %vm211 = vcmask 1043456
        %v213 = vsel %vm211, %v205, 0
        %v216 = vsel %vm211, %v206, 0
        %218 = vmatprep.subr.mxu0 0.0
        %219 = vmatpush1.msra.mxu0 0.0
        %220 = vmatprep.subr.mxu0 0.0
        %221 = vmatpush1.msra.mxu0 0.0
        %222 = vmatprep.subr.mxu0 0.0
        %223 = vmatpush1.msra.mxu0 0.0
        %224 = vmatprep.subr.mxu0 0.0
        %225 = vmatpush1.msra.mxu0 0.0
        %226 = vmatprep.subr.mxu0 0.0
        %227 = vmatpush1.msra.mxu0 0.0
        %228 = vmatprep.subr.mxu0 0.0
        %229 = vmatpush1.msra.mxu0 0.0
        %230 = vmatprep.subr.mxu0 0.0
        %231 = vmatpush1.msra.mxu0 0.0
        %232 = vmatprep.subr.mxu0 0.0
        %233 = vmatpush1.msra.mxu0 0.0
        %234 = vmatprep.subr.mxu0 0.0
        %235 = vmatpush1.msra.mxu0 0.0
        %236 = vmatprep.subr.mxu0 0.0
        %237 = vmatpush1.msra.mxu0 0.0
        %238 = vmatprep.subr.mxu0 0.0
        %239 = vmatpush1.msra.mxu0 0.0
        %240 = vmatprep.subr.mxu0 %v216
        %241 = vmatpush1.msra.mxu0 %v213
        %242 = vmatprep.subr.mxu0 %v204
        %243 = vmatpush1.msra.mxu0 %v203
        %244 = vmatprep.subr.mxu0 %v202
        %245 = vmatpush1.msra.mxu0 %v201
        %246 = vmatprep.subr.mxu0 %v200
        %247 = vmatpush1.msra.mxu0 %v199
        %248 = vmatprep.subr.mxu0 %v198
        %249 = vmatpush1.msra.mxu0 %v197
        %250 = vmatprep.subr.mxu0 0.0
        %251 = vmatpush2.msra.mxu0 0.0
        %252 = vmatprep.subr.mxu0 0.0
        %253 = vmatpush2.msra.mxu0 0.0
        %254 = vmatprep.subr.mxu0 0.0
        %255 = vmatpush2.msra.mxu0 0.0
        %256 = vmatprep.subr.mxu0 0.0
        %257 = vmatpush2.msra.mxu0 0.0
        %258 = vmatprep.subr.mxu0 0.0
        %259 = vmatpush2.msra.mxu0 0.0
        %260 = vmatprep.subr.mxu0 0.0
        %261 = vmatpush2.msra.mxu0 0.0
        %262 = vmatprep.subr.mxu0 0.0
        %263 = vmatpush2.msra.mxu0 0.0
        %264 = vmatprep.subr.mxu0 0.0
        %265 = vmatpush2.msra.mxu0 0.0
        %266 = vmatprep.subr.mxu0 0.0
        %267 = vmatpush2.msra.mxu0 0.0
        %268 = vmatprep.subr.mxu0 0.0
        %269 = vmatpush2.msra.mxu0 0.0
        %270 = vmatprep.subr.mxu0 0.0
        %271 = vmatpush2.msra.mxu0 0.0
        %272 = vmatprep.subr.mxu0 0.0
        %273 = vmatpush2.msra.mxu0 0.0
        %274 = vmatprep.subr.mxu0 0.0
        %275 = vmatpush2.msra.mxu0 0.0
        %276 = vmatprep.subr.mxu0 0.0
        %277 = vmatpush2.msra.mxu0 0.0
        %278 = vmatprep.subr.mxu0 0.0
        %279 = vmatpush2.msra.mxu0 0.0
        %280 = vmatprep.subr.mxu0 0.0
        %281 = vmatpush2.msra.mxu0 0.0
        %282 = vmatprep.mubr.f32.mxu0 0.0
        %283 = vmatmul.mubr.f32.gmra.mxu0 %v209
        %v284 = vpop.f32.mrf.mxu0
        %v285 = vadd.f32 0.0, %v284
        %v286 = vpop.f32.mrf.mxu0
        %v287 = vadd.f32 0.0, %v286
        %288 = vdwg.mxu0
        %v289 = vld [vmem:[%s2] sm:$0xff]
        %291 = vset.pattern.permute.xlu0 0
        %292 = vperm.xlu0 %291, %v289
        %v293 = vpop.permute.xlu0 %292
        %v295 = vmul.f32 %v285, %v293
        %v296 = vmul.f32 %v287, %v293
        %v297 = vld [vmem:[%s3] sm:$0xff]
        %299 = vset.pattern.permute.xlu0 0
        %300 = vperm.xlu0 %299, %v297
        %v301 = vpop.permute.xlu0 %300
        %v303 = vadd.f32 %v295, %v301
        %v304 = vadd.f32 %v296, %v301
        %v305 = vmax.f32 %v303, 0.0
        %v306 = vmax.f32 %v304, 0.0
        %307 = vst [vmem:[%s190] sm:$0xff] %v305
        %308 = vst [vmem:[%s190 + $0x8] sm:$0xff] %v306
        %s309 = sand.u32 %s115, 1
        %s310 = scalar_lea.sflag [#allocation3], %s309
        %s311 = sand.u32 %s115, 1
        %s312 = smul.addr %s311, 16
        %s313 = scalar_lea.vmem [#allocation2], %s312
        // Predicated region
        $region37: #{tpu_custom_call.1} parent=35 // pred_check
          %p314 = pneg %p125
        $region38: #{tpu_custom_call.1} parent=35 // pred_check_branch
          %316 = sbr.rel (%p314) target = $region40
        $region39: #{tpu_custom_call.1} parent=35 // pred_region
          %s318 = ssub.s32 256, 256
          %319 = vsyncadd %s310, %s318
          %s320 = smul.addr %s18, 2
          %s321 = smul.addr %s320, 128
          %s322 = scalar_lea.hbm %s4, %s321
          %s324 = sshll.u32 %s313, 4
          %s325 = int_to_ptr.vmem [resolvable:$true] %s324
          %327 = dma.vmem_to_hbm [thread:$0]  %s325, 256, %s322, %s310
        $region40: #{tpu_custom_call.1} parent=35 // pred_fallthru
          _
      $region36: #{tpu_custom_call.1} parent=5 // pred_fallthru
        _
      %p328 = scmp.le.s32.totalorder 2, %s13
      // Predicated region
      $region41: #{tpu_custom_call.1} parent=5 // pred_check
        %p329 = pneg %p328
      $region42: #{tpu_custom_call.1} parent=5 // pred_check_branch
        %331 = sbr.rel (%p329) target = $region44
      $region43: #{tpu_custom_call.1} parent=5 // pred_region
        %s332 = ssub.s32 %s13, 2
        // Predicated region
        $region45: #{tpu_custom_call.1} parent=43 // pred_check
          %p333 = pneg %p131
        $region46: #{tpu_custom_call.1} parent=43 // pred_check_branch
          %335 = sbr.rel (%p333) target = $region48
        $region47: #{tpu_custom_call.1} parent=43 // pred_region
          %s336 = sand.u32 %s116, 1
          %s337 = scalar_lea.sflag [#allocation3], %s336
          %s338 = sand.u32 %s116, 1
          %s339 = smul.addr %s338, 16
          %s340 = scalar_lea.vmem [#allocation2], %s339
          %341 = dma.done %s337, 256
        $region48: #{tpu_custom_call.1} parent=43 // pred_fallthru
          _
      $region44: #{tpu_custom_call.1} parent=5 // pred_fallthru
        _
    $region6: #{tpu_custom_call.1} parent=1 // loop_footer
      %s17 = sadd.s32 1, %s13
    $region7: #{tpu_custom_call.1} parent=1 // loop_footer_branch
      %12 = sbr.rel target = $region3
    $region8: #{tpu_custom_call.1} parent=1 // loop_exit
      _
    %342 = vsyncpa [#allocation3], 1
    %s343 = scalar_lea.sflag [#allocation3], 1
    %344 = vsyncpa %s343, 1

</llo_original>
